<compile_context>
chip_gen: v6e
topology: v6e:2x2x1
jax: 0.10.0
libtpu: 0.0.40
codegen_flags: <defaults>
</compile_context>

<pallas_src>
import math

import jax
import jax.numpy as jnp
from jax.experimental import pallas as pl
from jax.experimental.pallas import tpu as pltpu

EPS_0 = 8.8541878128e-12

_LANE_CANDIDATES = (4096, 2048, 1024, 512, 256, 128)


def _eps_scale_kernel(scale_ref, x_ref, o_ref):
    # scale_ref: SMEM (1,) f32 scalar-prefetch value (already 1/EPS_0*sigmoid(w)).
    # x_ref / o_ref: (tile_rows, lane_width) lane-dense VMEM tiles.
    s = scale_ref[0]                                   # f32 scalar
    o_ref[...] = (x_ref[...].astype(jnp.float32) * s).astype(o_ref.dtype)


def learnable_epsilon_forward(x, weight, *, target_tile_bytes=4 * 1024 * 1024,
                              donate_input=False):
    """x: any shape (e.g. NCHW (B, C, H, W)); weight: scalar logit parameter."""
    orig_shape = x.shape
    dtype = x.dtype
    total = int(x.size)
    itemsize = jnp.dtype(dtype).itemsize

    # Scalar hoist: one sigmoid + one multiply on the scalar path, done once.
    scale_f32 = (1.0 / EPS_0) * jax.nn.sigmoid(jnp.asarray(weight, jnp.float32))

    def _jax_fallback():
        # Plain fused multiply: already 1 HBM read + 1 write, nothing to win.
        return (x.astype(jnp.float32) * scale_f32).astype(dtype)

    # Largest lane width (multiple of 128) that exactly divides the element
    # count, so the (rows, lane_width) view is a pure bitcast (no pad, no copy).
    lane_width = next((lw for lw in _LANE_CANDIDATES if lw <= max(total, 1)
                       and total % lw == 0), None)

    # Small / degenerate / genuinely-ragged fast path.
    # TODO(synk): ragged sizes (not a multiple of 128) could be handled
    # in-kernel with a masked pltpu.store on the last tile instead.
    if total == 0 or lane_width is None or total < 1024:
        return _jax_fallback()

    rows = total // lane_width

    # Dtype-aware packed sublane tile: f32 -> 8, bf16 -> 16, int8/fp8 -> 32.
    sublane = max(8, 32 // itemsize)

    # ~target_tile_bytes per tile, rounded down to the sublane multiple.
    tile_rows = (target_tile_bytes // (lane_width * itemsize)) // sublane * sublane
    tile_rows = max(sublane, tile_rows)
    if rows <= tile_rows:
        tile_rows = rows                 # whole array in one block (full-dim block)
        grid = (1,)
    else:
        grid = (pl.cdiv(rows, tile_rows),)   # uneven boundary block: OOB writes masked

    x2 = x.reshape(rows, lane_width)     # contiguous reshape == bitcast, no HBM pass
    scale = scale_f32.reshape(1)

    extra_kwargs = {}
    if donate_input:
        # Alias the tensor input (arg index 1; arg 0 is the scalar prefetch) to
        # the output — only beneficial when the caller actually donates x.
        extra_kwargs["input_output_aliases"] = {1: 0}

    out2 = pl.pallas_call(
        _eps_scale_kernel,
        out_shape=jax.ShapeDtypeStruct((rows, lane_width), dtype),
        grid_spec=pltpu.PrefetchScalarGridSpec(
            num_scalar_prefetch=1,                 # `scale` lands in SMEM
            grid=grid,
            in_specs=[
                pl.BlockSpec((tile_rows, lane_width), lambda i, s: (i, 0)),
            ],
            out_specs=pl.BlockSpec((tile_rows, lane_width), lambda i, s: (i, 0)),
        ),
        compiler_params=pltpu.CompilerParams(
            # Independent row tiles: shard across TCs where available.
            dimension_semantics=("parallel",),
            # 4 MiB tiles x 2 arrays x 2 buffers = 16 MiB resident (+scratch):
            # above v5e's 16 MiB scoped default, well under v7x's 64 MiB physical.
            vmem_limit_bytes=48 * 1024 * 1024,
        ),
        cost_estimate=pl.CostEstimate(
            flops=total,
            transcendentals=0,
            bytes_accessed=2 * total * itemsize,
        ),
        **extra_kwargs,
    )(scale, x2)

    return out2.reshape(orig_shape)


if __name__ == "__main__":
    # Deterministic parameter init, matching the PyTorch __init__:
    #   weight = log(init_epsilon / (1 - init_epsilon))
    init_epsilon = 0.3
    weight = jnp.float32(math.log(init_epsilon / (1.0 - init_epsilon)))
    scale_ref = (1.0 / EPS_0) * jax.nn.sigmoid(weight)

    key = jax.random.PRNGKey(0)

    # 1) Small NCHW input (single lane-dense block).
    x = jax.random.normal(key, (2, 4, 16, 16), dtype=jnp.float32)
    out = jax.block_until_ready(learnable_epsilon_forward(x, weight))
    ref = scale_ref * x
    assert out.shape == x.shape and out.dtype == x.dtype
    assert jnp.allclose(out, ref, rtol=1e-5, atol=0.0), "f32 mismatch vs reference"

    # 2) Multi-tile path with an uneven boundary block (small tiles force
    #    grid > 1 and a partial final block -> exercises OOB write masking,
    #    no wrapper pad / slice involved).
    xb = jax.random.normal(jax.random.PRNGKey(1), (3, 5, 32, 40), dtype=jnp.float32)
    outb = jax.block_until_ready(
        learnable_epsilon_forward(xb, weight, target_tile_bytes=64 * 1024))
    refb = scale_ref * xb
    assert jnp.allclose(outb, refb, rtol=1e-5, atol=0.0), "boundary mismatch"

    # 3) bf16 input: multiply in f32, product cast back to bf16.
    xh = x.astype(jnp.bfloat16)
    outh = jax.block_until_ready(learnable_epsilon_forward(xh, weight))
    refh = (xh.astype(jnp.float32) * scale_ref).astype(jnp.bfloat16)
    assert outh.dtype == jnp.bfloat16
    assert jnp.allclose(outh.astype(jnp.float32), refh.astype(jnp.float32),
                        rtol=1e-2, atol=0.0), "bf16 mismatch"

    print("KERNEL_OK")
</pallas_src>

<mosaic_0001>
module attributes {stable_mosaic.version = 11 : i64} {
  func.func @_eps_scale_kernel(%arg0: i32, %arg1: memref<1xf32, #tpu.memory_space<smem>>, %arg2: memref<1x2048xf32, #tpu.memory_space<vmem>>, %arg3: memref<1x2048xf32, #tpu.memory_space<vmem>>) attributes {dimension_semantics = [#tpu.dimension_semantics<parallel>], iteration_bounds = array<i64: 1>, scalar_prefetch = 1 : i64, scratch_operands = 0 : i64, tpu.core_type = #tpu.core_type<tc>, window_params = [{transform_indices = @transform_0, window_bounds = array<i64: 1, 2048>}, {transform_indices = @transform_1, window_bounds = array<i64: 1, 2048>}]} {
    %c0 = arith.constant 0 : index
    %0 = memref.load %arg1[%c0] : memref<1xf32, #tpu.memory_space<smem>>
    %c0_0 = arith.constant 0 : index
    %c0_1 = arith.constant 0 : index
    %1 = vector.load %arg2[%c0_0, %c0_1] : memref<1x2048xf32, #tpu.memory_space<vmem>>, vector<1x2048xf32>
    %2 = vector.broadcast %0 : f32 to vector<1x2048xf32>
    %3 = arith.mulf %1, %2 : vector<1x2048xf32>
    %c0_2 = arith.constant 0 : index
    %c0_3 = arith.constant 0 : index
    %4 = vector.load %arg3[%c0_2, %c0_3] : memref<1x2048xf32, #tpu.memory_space<vmem>>, vector<1x2048xf32>
    tpu.vector_store %arg3[%c0_2, %c0_3], %3 {strides = array<i32>} : memref<1x2048xf32, #tpu.memory_space<vmem>>, vector<1x2048xf32>,
    return
  }
  func.func @transform_0(%arg0: i32, %arg1: memref<1xf32, #tpu.memory_space<smem>>) -> (i32, i32) {
    %c0_i32 = arith.constant 0 : i32
    %c0_i32_0 = arith.constant 0 : i32
    return %arg0, %c0_i32 : i32, i32
  }
  func.func @transform_1(%arg0: i32, %arg1: memref<1xf32, #tpu.memory_space<smem>>) -> (i32, i32) {
    %c0_i32 = arith.constant 0 : i32
    %c0_i32_0 = arith.constant 0 : i32
    return %arg0, %c0_i32 : i32, i32
  }
}

</mosaic_0001>

<llo_original>
// kernel: tpu_custom_call.1
$region0: #{tpu_custom_call.1}
  #allocation0 [shape = 'u32[]', space=smem, size = 0x4, offset = 0x4, fixed_abs, tag = 'smem constant byte address 0x4 - core index']
  #allocation1 [shape = 'u32[144,128]{1,0:T(1,128)}', space=vmem, size = 0x12000, scoped, tag = 'internal scratch']
  #allocation2 [shape = 's32[1]{0}', space=sflag, size = 0x4, scoped, tag = 'scoped memory for tpu_custom_call.1']
  #allocation3 [shape = 'f32[1]{0:T(128)S(6)}', space=smem, size = 0x200, scoped, tag = 'prefetched SMEM operand 0']
  %s0 = inlined_call_operand.<no memory space> [shape: f32[1], index: 0, kind: input, shape index: {}]
  %s1 = inlined_call_operand.hbm [shape: f32[1,2048], index: 1, kind: input, shape index: {}]
  %s2 = inlined_call_operand.hbm [shape: f32[1,2048], index: 2, kind: output, shape index: {}]
  %s3 = sld [smem:[#allocation0]]
  $region18: #{tpu_custom_call.1} parent=0
    _
  %s5 = ssub.s32 1, %s3
  %s6 = scalar_select 0, %s5, %s3
  %7 = sst [smem:[#allocation3]] %s0
  $region1: #{tpu_custom_call.1} parent=0
    #allocation4 [shape = 'u8[8192]{0}', space=vmem, size = 0x2000, scoped, tag = 'input window, operand 1, single buffered']
    #allocation5 [shape = 's32[1]{0}', space=sflag, size = 0x4, scoped, tag = 'scoped memory for tpu_custom_call.1']
    #allocation6 [shape = 's32[1]{0}', space=sflag, size = 0x4, scoped, tag = 'scoped memory for tpu_custom_call.1']
    #allocation7 [shape = 'u8[8192]{0}', space=vmem, size = 0x2000, scoped, tag = 'output window, operand 0, single buffered']
    %8 = vsyncpa [#allocation5], 0
    %9 = vsyncpa [#allocation6], 0
    // Predicated region
    $region2: #{tpu_custom_call.1} parent=1 // pred_check
      _
    $region3: #{tpu_custom_call.1} parent=1 // pred_check_branch
      %11 = sbr.rel (0) target = $region5
    $region4: #{tpu_custom_call.1} parent=1 // pred_region
      %s13 = ssub.s32 256, 256
      %14 = vsyncadd [#allocation5], %s13
      %s16 = sshll.u32 [#allocation4], 4
      %s17 = int_to_ptr.vmem [resolvable:$true] %s16
      %19 = dma.hbm_to_vmem [thread:$0]  %s1, 256, %s17, [#allocation5]
    $region5: #{tpu_custom_call.1} parent=1 // pred_fallthru
      _
    // Predicated region
    $region6: #{tpu_custom_call.1} parent=1 // pred_check
      _
    $region7: #{tpu_custom_call.1} parent=1 // pred_check_branch
      %21 = sbr.rel (0) target = $region9
    $region8: #{tpu_custom_call.1} parent=1 // pred_region
      %22 = dma.done [#allocation5], 256
    $region9: #{tpu_custom_call.1} parent=1 // pred_fallthru
      _
    %s23 = sld [smem:[#allocation3]]
    %v24 = vld [vmem:[#allocation4] sm:$0xff]
    %v25 = vld [vmem:[#allocation4 + $0x8] sm:$0xff]
    %v26 = vstv %s23
    %v27 = vmul.f32 %v24, %v26
    %v28 = vmul.f32 %v25, %v26
    %29 = vst [vmem:[#allocation7] sm:$0xff] %v27
    %30 = vst [vmem:[#allocation7 + $0x8] sm:$0xff] %v28
    // Predicated region
    $region10: #{tpu_custom_call.1} parent=1 // pred_check
      _
    $region11: #{tpu_custom_call.1} parent=1 // pred_check_branch
      %32 = sbr.rel (0) target = $region13
    $region12: #{tpu_custom_call.1} parent=1 // pred_region
      %s34 = ssub.s32 256, 256
      %35 = vsyncadd [#allocation6], %s34
      %s37 = sshll.u32 [#allocation7], 4
      %s38 = int_to_ptr.vmem [resolvable:$true] %s37
      %40 = dma.vmem_to_hbm [thread:$0]  %s38, 256, %s2, [#allocation6]
    $region13: #{tpu_custom_call.1} parent=1 // pred_fallthru
      _
    // Predicated region
    $region14: #{tpu_custom_call.1} parent=1 // pred_check
      _
    $region15: #{tpu_custom_call.1} parent=1 // pred_check_branch
      %42 = sbr.rel (0) target = $region17
    $region16: #{tpu_custom_call.1} parent=1 // pred_region
      %43 = dma.done [#allocation6], 256
    $region17: #{tpu_custom_call.1} parent=1 // pred_fallthru
      _
    %44 = vsyncpa [#allocation5], 1
    %45 = vsyncpa [#allocation6], 1

</llo_original>
